<compile_context>
chip_gen: v7x
topology: tpu7x:2x2x1
jax: 0.10.0
libtpu: 0.0.40
codegen_flags: <defaults>
</compile_context>

<pallas_src>
import functools

import jax
import jax.numpy as jnp
from jax.experimental import pallas as pl
from jax.experimental.pallas import tpu as pltpu

_SUBLANE = 8    # f32 sublane multiple
_LANE = 128     # lane width


def _round_up(n, m):
    return ((n + m - 1) // m) * m


def linear_kernel(x_ref, wt_ref, b_ref, o_ref):
    # x:  (Bp, Kp)  sublane-aligned activations (zero-padded rows/cols)
    # wt: (Kp, Np)  pre-transposed weight (Fin, Fout), zero-padded
    # b:  (1, Np)   bias row, zero-padded to lane width
    # Zero padding on the contraction dim keeps the matmul exact.
    y = jnp.dot(x_ref[...], wt_ref[...], preferred_element_type=jnp.float32)
    # (1, Np) broadcasts across the sublane (batch) axis — no wrapper pre-broadcast.
    o_ref[...] = (y + b_ref[...]).astype(o_ref.dtype)


def make_simple_net_forward(weight, bias):
    """Build a jitted forward: y = x @ weight.T + bias (PyTorch nn.Linear semantics).

    Weight/bias padding + transpose are done ONCE here (parameter-load time),
    so the per-call hot path is: pad x -> pallas_call -> slice, all fused in one jit.
    """
    Fout, Fin = weight.shape
    Kp = _round_up(max(Fin, 1), _SUBLANE)   # small contraction pad (not 128)
    Np = _round_up(max(Fout, 1), _LANE)     # lane-dense output dim

    f32 = jnp.float32
    wt_p = jnp.zeros((Kp, Np), f32).at[:Fin, :Fout].set(weight.astype(f32).T)
    b_p = jnp.zeros((1, Np), f32).at[0, :Fout].set(bias.astype(f32))

    @functools.partial(jax.jit, static_argnames=())
    def forward(x):
        B = x.shape[0]
        Bp = _round_up(max(B, 1), _SUBLANE)  # sublane-aligned batch
        # Single fused pad (zero-extend) instead of alloc + dynamic-update-slice.
        x_p = jnp.pad(x.astype(f32), ((0, Bp - B), (0, Kp - Fin)))

        out_p = pl.pallas_call(
            linear_kernel,
            out_shape=jax.ShapeDtypeStruct((Bp, Np), f32),
            # No grid: whole arrays resident in VMEM, no pipeline/grid-step overhead.
            in_specs=[
                pl.BlockSpec(memory_space=pltpu.MemorySpace.VMEM),
                pl.BlockSpec(memory_space=pltpu.MemorySpace.VMEM),
                pl.BlockSpec(memory_space=pltpu.MemorySpace.VMEM),
            ],
            out_specs=pl.BlockSpec(memory_space=pltpu.MemorySpace.VMEM),
            cost_estimate=pl.CostEstimate(
                flops=2 * Bp * Kp * Np,
                transcendentals=0,
                bytes_accessed=4 * (Bp * Kp + Kp * Np + Np + Bp * Np),
            ),
        )(x_p, wt_p, b_p)

        # Slice the valid region inside the same jit so XLA fuses it.
        # Note: padded batch rows of out_p hold the bias (x rows were zero),
        # but they are discarded here.
        return out_p[:B, :Fout].astype(x.dtype)
        # TODO(synk): for large B, tile M only (grid=(cdiv(B, tm),), K/N whole)
        # with dimension_semantics=("parallel",) to engage v7x's 2 TensorCores;
        # derive tm from the 32 MiB scoped-VMEM budget (v7x), not v6e's 128 MiB.

    return forward


if __name__ == "__main__":
    key = jax.random.PRNGKey(0)
    kx, kw, kb = jax.random.split(key, 3)

    B, Fin, Fout = 2, 5, 3
    bound = 1.0 / (Fin ** 0.5)   # PyTorch-like uniform init range
    x = jax.random.normal(kx, (B, Fin), dtype=jnp.float32)
    weight = jax.random.uniform(kw, (Fout, Fin), minval=-bound, maxval=bound,
                                dtype=jnp.float32)
    bias = jax.random.uniform(kb, (Fout,), minval=-bound, maxval=bound,
                              dtype=jnp.float32)

    forward = make_simple_net_forward(weight, bias)   # one-time param prep
    out = forward(x)
    out = jax.block_until_ready(out)

    ref = x @ weight.T + bias
    assert out.shape == (B, Fout)
    assert jnp.allclose(out, ref, atol=1e-5, rtol=1e-5)
    print("KERNEL_OK")
</pallas_src>

<mosaic_0001>
module attributes {stable_mosaic.version = 11 : i64} {
  func.func @linear_kernel(%arg0: memref<8x8xf32, #tpu.memory_space<vmem>>, %arg1: memref<8x128xf32, #tpu.memory_space<vmem>>, %arg2: memref<1x128xf32, #tpu.memory_space<vmem>>, %arg3: memref<8x128xf32, #tpu.memory_space<vmem>>) attributes {dimension_semantics = [], scalar_prefetch = 0 : i64, scratch_operands = 0 : i64, tpu.core_type = #tpu.core_type<tc>} {
    %c0 = arith.constant 0 : index
    %c0_0 = arith.constant 0 : index
    %0 = vector.load %arg0[%c0, %c0_0] : memref<8x8xf32, #tpu.memory_space<vmem>>, vector<8x8xf32>
    %c0_1 = arith.constant 0 : index
    %c0_2 = arith.constant 0 : index
    %1 = vector.load %arg1[%c0_1, %c0_2] : memref<8x128xf32, #tpu.memory_space<vmem>>, vector<8x128xf32>
    %cst = arith.constant dense<0.000000e+00> : vector<8x128xf32>
    %2 = tpu.matmul %0, %1, %cst {dimension_numbers = #tpu.dot_dimension_numbers<[1], [0], [0], [1], [0, 0, 1, 1], [], []>} : vector<8x8xf32>, vector<8x128xf32>, vector<8x128xf32> -> vector<8x128xf32>
    %c0_3 = arith.constant 0 : index
    %c0_4 = arith.constant 0 : index
    %3 = vector.load %arg2[%c0_3, %c0_4] : memref<1x128xf32, #tpu.memory_space<vmem>>, vector<1x128xf32>
    %4 = vector.broadcast %3 : vector<1x128xf32> to vector<8x128xf32>
    %5 = arith.addf %2, %4 : vector<8x128xf32>
    %c0_5 = arith.constant 0 : index
    %c0_6 = arith.constant 0 : index
    %6 = vector.load %arg3[%c0_5, %c0_6] : memref<8x128xf32, #tpu.memory_space<vmem>>, vector<8x128xf32>
    tpu.vector_store %arg3[%c0_5, %c0_6], %5 {strides = array<i32>} : memref<8x128xf32, #tpu.memory_space<vmem>>, vector<8x128xf32>,
    return
  }
}

</mosaic_0001>

<llo_original>
// kernel: forward.1
$region0: #{forward.1}
  #allocation0 [shape = 'u32[]', space=smem, size = 0x4, offset = 0x4, fixed_abs, tag = 'smem constant byte address 0x4 - core index']
  #allocation1 [shape = 'u32[144,128]{1,0:T(1,128)}', space=vmem, size = 0x12000, scoped, tag = 'internal scratch']
  %s0 = inlined_call_operand.vmem [shape: f32[8,8], index: 0, kind: input, shape index: {}]
  %s1 = inlined_call_operand.vmem [shape: f32[8,128], index: 1, kind: input, shape index: {}]
  %s2 = inlined_call_operand.vmem [shape: f32[1,128], index: 2, kind: input, shape index: {}]
  %s3 = inlined_call_operand.vmem [shape: f32[8,128], index: 3, kind: output, shape index: {}]
  %s4 = sld [smem:[#allocation0]]
  $region22: #{forward.1} parent=0
    _
  %s6 = ssub.s32 1, %s4
  %s7 = scalar_select 0, %s6, %s4
  // Predicated region
  $region2: #{forward.1} parent=0 // pred_check
    _
  $region3: #{forward.1} parent=0 // pred_check_branch
    %9 = sbr.rel (0) target = $region5
  $region4: #{forward.1} parent=0 // pred_region
    _
  $region5: #{forward.1} parent=0 // pred_fallthru
    _
  // Predicated region
  $region6: #{forward.1} parent=0 // pred_check
    _
  $region7: #{forward.1} parent=0 // pred_check_branch
    %11 = sbr.rel (0) target = $region9
  $region8: #{forward.1} parent=0 // pred_region
    _
  $region9: #{forward.1} parent=0 // pred_fallthru
    _
  // Predicated region
  $region10: #{forward.1} parent=0 // pred_check
    _
  $region11: #{forward.1} parent=0 // pred_check_branch
    %13 = sbr.rel (0) target = $region13
  $region12: #{forward.1} parent=0 // pred_region
    _
  $region13: #{forward.1} parent=0 // pred_fallthru
    _
  %v14 = vld [vmem:[%s0] sm:$0xff]
  %v15 = vld [vmem:[%s1] sm:$0xff]
  %v16 = vld [vmem:[%s2] sm:$0x1]
  %v18 = vlaneseq
  %v19 = vshrl.u32 %v18, 7
  %v20 = vsub.s32 0, %v19
  %v21 = vrot.slane %v16, %v20
  %vm23 = vcmask 64512
  %v25 = vsel %vm23, %v14, 0
  %27 = vmatprep.subr.mxu0 0.0
  %28 = vmatpush1.msra.mxu0 %v15
  %29 = vmatprep.subr.mxu0 0.0
  %30 = vmatpush1.msra.mxu0 0.0
  %31 = vmatprep.subr.mxu0 0.0
  %32 = vmatpush1.msra.mxu0 0.0
  %33 = vmatprep.subr.mxu0 0.0
  %34 = vmatpush1.msra.mxu0 0.0
  %35 = vmatprep.subr.mxu0 0.0
  %36 = vmatpush1.msra.mxu0 0.0
  %37 = vmatprep.subr.mxu0 0.0
  %38 = vmatpush1.msra.mxu0 0.0
  %39 = vmatprep.subr.mxu0 0.0
  %40 = vmatpush1.msra.mxu0 0.0
  %41 = vmatprep.subr.mxu0 0.0
  %42 = vmatpush1.msra.mxu0 0.0
  %43 = vmatprep.subr.mxu0 0.0
  %44 = vmatpush1.msra.mxu0 0.0
  %45 = vmatprep.subr.mxu0 0.0
  %46 = vmatpush1.msra.mxu0 0.0
  %47 = vmatprep.subr.mxu0 0.0
  %48 = vmatpush1.msra.mxu0 0.0
  %49 = vmatprep.subr.mxu0 0.0
  %50 = vmatpush1.msra.mxu0 0.0
  %51 = vmatprep.subr.mxu0 0.0
  %52 = vmatpush1.msra.mxu0 0.0
  %53 = vmatprep.subr.mxu0 0.0
  %54 = vmatpush1.msra.mxu0 0.0
  %55 = vmatprep.subr.mxu0 0.0
  %56 = vmatpush1.msra.mxu0 0.0
  %57 = vmatprep.subr.mxu0 0.0
  %58 = vmatpush1.msra.mxu0 0.0
  %59 = vmatprep.subr.mxu0 0.0
  %60 = vmatpush1.msra.mxu0 0.0
  %61 = vmatprep.subr.mxu0 0.0
  %62 = vmatpush1.msra.mxu0 0.0
  %63 = vmatprep.subr.mxu0 0.0
  %64 = vmatpush1.msra.mxu0 0.0
  %65 = vmatprep.subr.mxu0 0.0
  %66 = vmatpush1.msra.mxu0 0.0
  %67 = vmatprep.subr.mxu0 0.0
  %68 = vmatpush1.msra.mxu0 0.0
  %69 = vmatprep.subr.mxu0 0.0
  %70 = vmatpush1.msra.mxu0 0.0
  %71 = vmatprep.subr.mxu0 0.0
  %72 = vmatpush1.msra.mxu0 0.0
  %73 = vmatprep.subr.mxu0 0.0
  %74 = vmatpush1.msra.mxu0 0.0
  %75 = vmatprep.subr.mxu0 0.0
  %76 = vmatpush1.msra.mxu0 0.0
  %77 = vmatprep.subr.mxu0 0.0
  %78 = vmatpush1.msra.mxu0 0.0
  %79 = vmatprep.subr.mxu0 0.0
  %80 = vmatpush1.msra.mxu0 0.0
  %81 = vmatprep.subr.mxu0 0.0
  %82 = vmatpush1.msra.mxu0 0.0
  %83 = vmatprep.subr.mxu0 0.0
  %84 = vmatpush1.msra.mxu0 0.0
  %85 = vmatprep.subr.mxu0 0.0
  %86 = vmatpush1.msra.mxu0 0.0
  %87 = vmatprep.subr.mxu0 0.0
  %88 = vmatpush1.msra.mxu0 0.0
  %89 = vmatprep.subr.mxu0 0.0
  %90 = vmatpush1.msra.mxu0 0.0
  %91 = vmatprep.mubr.f32.mxu0 0.0
  %92 = vmatmul.mubr.f32.gmra.mrb[0].mxu0 %v25
  %v93 = vpop.f32.mrb[0].mxu0
  %v94 = vadd.f32 %v21, %v93
  %v95 = vpop.f32.mrb[0].mxu0
  %96 = vdwg.mxu0
  %97 = vst [vmem:[%s3] sm:$0xff] %v94
  // Predicated region
  $region14: #{forward.1} parent=0 // pred_check
    _
  $region15: #{forward.1} parent=0 // pred_check_branch
    %99 = sbr.rel (0) target = $region17
  $region16: #{forward.1} parent=0 // pred_region
    _
  $region17: #{forward.1} parent=0 // pred_fallthru
    _
  // Predicated region
  $region18: #{forward.1} parent=0 // pred_check
    _
  $region19: #{forward.1} parent=0 // pred_check_branch
    %101 = sbr.rel (0) target = $region21
  $region20: #{forward.1} parent=0 // pred_region
    _
  $region21: #{forward.1} parent=0 // pred_fallthru
    _

</llo_original>
